<compile_context>
chip_gen: v5e
topology: v5e:2x2
jax: 0.10.0
libtpu: 0.0.40
codegen_flags: <defaults>
</compile_context>

<pallas_src>
import functools
import math

import jax
import jax.numpy as jnp
from jax import lax
from jax.experimental import pallas as pl
from jax.experimental.pallas import tpu as pltpu


def _mha_kernel(q_ref, k_ref, v_ref,
                wq_ref, bq_ref, wk_ref, bk_ref, wv_ref, bv_ref,
                wo_ref, bo_ref,
                o_ref,
                acc_ref,
                *, d_head: int):
    """One grid step = one (batch, head) pair."""
    h = pl.program_id(1)
    n_head = pl.num_programs(1)

    @pl.when(h == 0)
    def _init():
        acc_ref[...] = jnp.zeros_like(acc_ref)

    # (S, D) activations; cast to bf16 for the MXU (accumulation stays f32).
    q_in = q_ref[0].astype(jnp.bfloat16)
    k_in = k_ref[0].astype(jnp.bfloat16)
    v_in = v_ref[0].astype(jnp.bfloat16)

    # Per-head projections: (S, D) @ (D, d_head) + bias -> (S, d_head) f32.
    q_h = jnp.dot(q_in, wq_ref[0], preferred_element_type=jnp.float32) + bq_ref[0]
    k_h = jnp.dot(k_in, wk_ref[0], preferred_element_type=jnp.float32) + bk_ref[0]
    v_h = jnp.dot(v_in, wv_ref[0], preferred_element_type=jnp.float32) + bv_ref[0]

    # Scale the small (S, d_head) operand instead of the (S, S) scores.
    q_h = q_h * (1.0 / math.sqrt(float(d_head)))

    # scores = q_h @ k_h^T without materializing a transpose: contract the
    # last dim of both operands directly on the MXU.
    scores = lax.dot_general(
        q_h.astype(jnp.bfloat16), k_h.astype(jnp.bfloat16),
        dimension_numbers=(((1,), (1,)), ((), ())),
        preferred_element_type=jnp.float32)                     # (S, S) f32

    # Softmax with deferred normalization (all elementwise math in f32).
    m = jnp.max(scores, axis=-1, keepdims=True)                 # (S, 1)
    p = jnp.exp(scores - m)                                     # (S, S)
    denom = jnp.sum(p, axis=-1, keepdims=True)                  # (S, 1)

    ctx = jnp.dot(p.astype(jnp.bfloat16), v_h.astype(jnp.bfloat16),
                  preferred_element_type=jnp.float32)           # (S, d_head)
    ctx = ctx * pl.reciprocal(denom, approx=True)               # EUP, ~free

    # fc_out contribution of this head: (S, d_head) @ (d_head, D) -> (S, D),
    # accumulated lane-dense into the f32 scratch.
    acc_ref[...] += jnp.dot(ctx.astype(jnp.bfloat16), wo_ref[0],
                            preferred_element_type=jnp.float32)

    @pl.when(h == n_head - 1)
    def _finalize():
        o_ref[0] = (acc_ref[...] + bo_ref[...]).astype(o_ref.dtype)


def multi_head_attention(q, k, v, params, *, n_head: int):
    """q, k, v: [B, S, D] float32. params: dict of Linear weights/biases (torch layout)."""
    B, S, D = q.shape
    assert D % n_head == 0
    d_head = D // n_head

    f32, bf16 = jnp.float32, jnp.bfloat16

    # torch.nn.Linear: y = x @ W.T + b, W of shape (out, in).
    # Head-major weight prep on the host so the kernel never slices lanes:
    #   wq_h[h] = (Wq.T)[:, h*dh:(h+1)*dh]   -> (n_head, D, d_head)
    #   wo_h[h] = (Wo.T)[h*dh:(h+1)*dh, :]   -> (n_head, d_head, D)
    def split_in_proj(w):
        wt = w.astype(f32).T                                   # (D_in, D_out)
        return wt.reshape(D, n_head, d_head).transpose(1, 0, 2).astype(bf16)

    wq_h = split_in_proj(params["wq"])
    wk_h = split_in_proj(params["wk"])
    wv_h = split_in_proj(params["wv"])
    wo_h = params["wo"].astype(f32).T.reshape(n_head, d_head, D).astype(bf16)

    bq_h = params["bq"].astype(f32).reshape(n_head, 1, d_head)
    bk_h = params["bk"].astype(f32).reshape(n_head, 1, d_head)
    bv_h = params["bv"].astype(f32).reshape(n_head, 1, d_head)
    bo = params["bo"].astype(f32).reshape(1, D)

    act_spec = pl.BlockSpec((1, S, D), lambda b, h: (b, 0, 0))
    w_in_spec = pl.BlockSpec((1, D, d_head), lambda b, h: (h, 0, 0))
    b_in_spec = pl.BlockSpec((1, 1, d_head), lambda b, h: (h, 0, 0))
    w_out_spec = pl.BlockSpec((1, d_head, D), lambda b, h: (h, 0, 0))
    b_out_spec = pl.BlockSpec((1, D), lambda b, h: (0, 0))

    kernel = functools.partial(_mha_kernel, d_head=d_head)

    return pl.pallas_call(
        kernel,
        out_shape=jax.ShapeDtypeStruct((B, S, D), q.dtype),
        grid_spec=pltpu.PrefetchScalarGridSpec(
            num_scalar_prefetch=0,
            grid=(B, n_head),
            in_specs=[act_spec, act_spec, act_spec,
                      w_in_spec, b_in_spec,
                      w_in_spec, b_in_spec,
                      w_in_spec, b_in_spec,
                      w_out_spec, b_out_spec],
            out_specs=pl.BlockSpec((1, S, D), lambda b, h: (b, 0, 0)),
            scratch_shapes=[pltpu.VMEM((S, D), jnp.float32)],
        ),
        compiler_params=pltpu.CompilerParams(
            dimension_semantics=("parallel", "arbitrary"),
            vmem_limit_bytes=32 * 1024 * 1024,
        ),
    )(q, k, v, wq_h, bq_h, wk_h, bk_h, wv_h, bv_h, wo_h, bo)


def _reference(q, k, v, params, *, n_head: int):
    """Pure-JAX f32 reference mirroring the PyTorch forward (mask=None)."""
    B, S, D = q.shape
    d_head = D // n_head

    def lin(x, w, b):
        return x @ w.T + b

    qp = lin(q, params["wq"], params["bq"]).reshape(B, S, n_head, d_head).transpose(0, 2, 1, 3)
    kp = lin(k, params["wk"], params["bk"]).reshape(B, S, n_head, d_head).transpose(0, 2, 1, 3)
    vp = lin(v, params["wv"], params["bv"]).reshape(B, S, n_head, d_head).transpose(0, 2, 1, 3)

    scores = jnp.einsum("bhqd,bhkd->bhqk", qp, kp) / jnp.sqrt(jnp.float32(d_head))
    attn = jax.nn.softmax(scores, axis=-1)
    out = jnp.einsum("bhqk,bhkd->bhqd", attn, vp)
    out = out.transpose(0, 2, 1, 3).reshape(B, S, D)
    return lin(out, params["wo"], params["bo"])


if __name__ == "__main__":
    B, S, D, n_head = 2, 8, 32, 4

    key = jax.random.PRNGKey(0)
    keys = jax.random.split(key, 12)

    # Deterministic synthetic parameters (torch.nn.Linear layout: weight (out, in), bias (out,)).
    bound = 1.0 / math.sqrt(D)
    params = {
        "wq": jax.random.uniform(keys[0], (D, D), jnp.float32, -bound, bound),
        "bq": jax.random.uniform(keys[1], (D,), jnp.float32, -bound, bound),
        "wk": jax.random.uniform(keys[2], (D, D), jnp.float32, -bound, bound),
        "bk": jax.random.uniform(keys[3], (D,), jnp.float32, -bound, bound),
        "wv": jax.random.uniform(keys[4], (D, D), jnp.float32, -bound, bound),
        "bv": jax.random.uniform(keys[5], (D,), jnp.float32, -bound, bound),
        "wo": jax.random.uniform(keys[6], (D, D), jnp.float32, -bound, bound),
        "bo": jax.random.uniform(keys[7], (D,), jnp.float32, -bound, bound),
    }

    q = jax.random.normal(keys[8], (B, S, D), jnp.float32)
    k = jax.random.normal(keys[9], (B, S, D), jnp.float32)
    v = jax.random.normal(keys[10], (B, S, D), jnp.float32)

    out = multi_head_attention(q, k, v, params, n_head=n_head)
    out = jax.block_until_ready(out)

    ref = _reference(q, k, v, params, n_head=n_head)
    assert out.shape == (B, S, D)
    # bf16 MXU operands + approximate reciprocal -> looser tolerance than f32.
    assert jnp.allclose(out, ref, atol=5e-2, rtol=5e-2), "mismatch vs JAX reference"

    print("KERNEL_OK")
</pallas_src>

<mosaic_0001>
module attributes {stable_mosaic.version = 11 : i64} {
  func.func @_mha_kernel(%arg0: i32, %arg1: i32, %arg2: memref<1x8x32xf32, #tpu.memory_space<vmem>>, %arg3: memref<1x8x32xf32, #tpu.memory_space<vmem>>, %arg4: memref<1x8x32xf32, #tpu.memory_space<vmem>>, %arg5: memref<1x32x8xbf16, #tpu.memory_space<vmem>>, %arg6: memref<1x1x8xf32, #tpu.memory_space<vmem>>, %arg7: memref<1x32x8xbf16, #tpu.memory_space<vmem>>, %arg8: memref<1x1x8xf32, #tpu.memory_space<vmem>>, %arg9: memref<1x32x8xbf16, #tpu.memory_space<vmem>>, %arg10: memref<1x1x8xf32, #tpu.memory_space<vmem>>, %arg11: memref<1x8x32xbf16, #tpu.memory_space<vmem>>, %arg12: memref<1x32xf32, #tpu.memory_space<vmem>>, %arg13: memref<1x8x32xf32, #tpu.memory_space<vmem>>, %arg14: memref<8x32xf32, #tpu.memory_space<vmem>>) attributes {dimension_semantics = [#tpu.dimension_semantics<parallel>, #tpu.dimension_semantics<arbitrary>], iteration_bounds = array<i64: 2, 4>, scalar_prefetch = 0 : i64, scratch_operands = 1 : i64, tpu.core_type = #tpu.core_type<tc>, window_params = [{transform_indices = @transform_0, window_bounds = array<i64: 1, 8, 32>}, {transform_indices = @transform_1, window_bounds = array<i64: 1, 8, 32>}, {transform_indices = @transform_2, window_bounds = array<i64: 1, 8, 32>}, {transform_indices = @transform_3, window_bounds = array<i64: 1, 32, 8>}, {transform_indices = @transform_4, window_bounds = array<i64: 1, 1, 8>}, {transform_indices = @transform_5, window_bounds = array<i64: 1, 32, 8>}, {transform_indices = @transform_6, window_bounds = array<i64: 1, 1, 8>}, {transform_indices = @transform_7, window_bounds = array<i64: 1, 32, 8>}, {transform_indices = @transform_8, window_bounds = array<i64: 1, 1, 8>}, {transform_indices = @transform_9, window_bounds = array<i64: 1, 8, 32>}, {pipeline_mode = #tpu.pipeline_mode<synchronous>, transform_indices = @transform_10, window_bounds = array<i64: 1, 32>}, {transform_indices = @transform_11, window_bounds = array<i64: 1, 8, 32>}]} {
    %c0_i32 = arith.constant 0 : i32
    %0 = arith.cmpi eq, %arg1, %c0_i32 : i32
    %1 = arith.extui %0 : i1 to i32
    %c0_i32_0 = arith.constant 0 : i32
    %2 = arith.cmpi ne, %1, %c0_i32_0 : i32
    scf.if %2 {
      %cst_43 = arith.constant 0.000000e+00 : f32
      %61 = vector.broadcast %cst_43 : f32 to vector<8x32xf32>
      %c0_44 = arith.constant 0 : index
      %c0_45 = arith.constant 0 : index
      %62 = vector.load %arg14[%c0_44, %c0_45] : memref<8x32xf32, #tpu.memory_space<vmem>>, vector<8x32xf32>
      tpu.vector_store %arg14[%c0_44, %c0_45], %61 {strides = array<i32>} : memref<8x32xf32, #tpu.memory_space<vmem>>, vector<8x32xf32>,
    } else {
    }
    %c0 = arith.constant 0 : index
    %c0_1 = arith.constant 0 : index
    %c0_2 = arith.constant 0 : index
    %3 = vector.load %arg2[%c0, %c0_1, %c0_2] : memref<1x8x32xf32, #tpu.memory_space<vmem>>, vector<1x8x32xf32>
    %4 = vector.shape_cast %3 : vector<1x8x32xf32> to vector<8x32xf32>
    %5 = arith.truncf %4 : vector<8x32xf32> to vector<8x32xbf16>
    %c0_3 = arith.constant 0 : index
    %c0_4 = arith.constant 0 : index
    %c0_5 = arith.constant 0 : index
    %6 = vector.load %arg3[%c0_3, %c0_4, %c0_5] : memref<1x8x32xf32, #tpu.memory_space<vmem>>, vector<1x8x32xf32>
    %7 = vector.shape_cast %6 : vector<1x8x32xf32> to vector<8x32xf32>
    %8 = arith.truncf %7 : vector<8x32xf32> to vector<8x32xbf16>
    %c0_6 = arith.constant 0 : index
    %c0_7 = arith.constant 0 : index
    %c0_8 = arith.constant 0 : index
    %9 = vector.load %arg4[%c0_6, %c0_7, %c0_8] : memref<1x8x32xf32, #tpu.memory_space<vmem>>, vector<1x8x32xf32>
    %10 = vector.shape_cast %9 : vector<1x8x32xf32> to vector<8x32xf32>
    %11 = arith.truncf %10 : vector<8x32xf32> to vector<8x32xbf16>
    %c0_9 = arith.constant 0 : index
    %c0_10 = arith.constant 0 : index
    %c0_11 = arith.constant 0 : index
    %12 = vector.load %arg5[%c0_9, %c0_10, %c0_11] : memref<1x32x8xbf16, #tpu.memory_space<vmem>>, vector<1x32x8xbf16>
    %13 = vector.shape_cast %12 : vector<1x32x8xbf16> to vector<32x8xbf16>
    %cst = arith.constant dense<0.000000e+00> : vector<8x8xf32>
    %14 = tpu.matmul %5, %13, %cst {dimension_numbers = #tpu.dot_dimension_numbers<[1], [0], [0], [1], [0, 0, 1, 1], [], []>} : vector<8x32xbf16>, vector<32x8xbf16>, vector<8x8xf32> -> vector<8x8xf32>
    %c0_12 = arith.constant 0 : index
    %c0_13 = arith.constant 0 : index
    %c0_14 = arith.constant 0 : index
    %15 = vector.load %arg6[%c0_12, %c0_13, %c0_14] : memref<1x1x8xf32, #tpu.memory_space<vmem>>, vector<1x1x8xf32>
    %16 = vector.shape_cast %15 : vector<1x1x8xf32> to vector<1x8xf32>
    %17 = vector.broadcast %16 : vector<1x8xf32> to vector<8x8xf32>
    %18 = arith.addf %14, %17 : vector<8x8xf32>
    %c0_15 = arith.constant 0 : index
    %c0_16 = arith.constant 0 : index
    %c0_17 = arith.constant 0 : index
    %19 = vector.load %arg7[%c0_15, %c0_16, %c0_17] : memref<1x32x8xbf16, #tpu.memory_space<vmem>>, vector<1x32x8xbf16>
    %20 = vector.shape_cast %19 : vector<1x32x8xbf16> to vector<32x8xbf16>
    %cst_18 = arith.constant dense<0.000000e+00> : vector<8x8xf32>
    %21 = tpu.matmul %8, %20, %cst_18 {dimension_numbers = #tpu.dot_dimension_numbers<[1], [0], [0], [1], [0, 0, 1, 1], [], []>} : vector<8x32xbf16>, vector<32x8xbf16>, vector<8x8xf32> -> vector<8x8xf32>
    %c0_19 = arith.constant 0 : index
    %c0_20 = arith.constant 0 : index
    %c0_21 = arith.constant 0 : index
    %22 = vector.load %arg8[%c0_19, %c0_20, %c0_21] : memref<1x1x8xf32, #tpu.memory_space<vmem>>, vector<1x1x8xf32>
    %23 = vector.shape_cast %22 : vector<1x1x8xf32> to vector<1x8xf32>
    %24 = vector.broadcast %23 : vector<1x8xf32> to vector<8x8xf32>
    %25 = arith.addf %21, %24 : vector<8x8xf32>
    %c0_22 = arith.constant 0 : index
    %c0_23 = arith.constant 0 : index
    %c0_24 = arith.constant 0 : index
    %26 = vector.load %arg9[%c0_22, %c0_23, %c0_24] : memref<1x32x8xbf16, #tpu.memory_space<vmem>>, vector<1x32x8xbf16>
    %27 = vector.shape_cast %26 : vector<1x32x8xbf16> to vector<32x8xbf16>
    %cst_25 = arith.constant dense<0.000000e+00> : vector<8x8xf32>
    %28 = tpu.matmul %11, %27, %cst_25 {dimension_numbers = #tpu.dot_dimension_numbers<[1], [0], [0], [1], [0, 0, 1, 1], [], []>} : vector<8x32xbf16>, vector<32x8xbf16>, vector<8x8xf32> -> vector<8x8xf32>
    %c0_26 = arith.constant 0 : index
    %c0_27 = arith.constant 0 : index
    %c0_28 = arith.constant 0 : index
    %29 = vector.load %arg10[%c0_26, %c0_27, %c0_28] : memref<1x1x8xf32, #tpu.memory_space<vmem>>, vector<1x1x8xf32>
    %30 = vector.shape_cast %29 : vector<1x1x8xf32> to vector<1x8xf32>
    %31 = vector.broadcast %30 : vector<1x8xf32> to vector<8x8xf32>
    %32 = arith.addf %28, %31 : vector<8x8xf32>
    %cst_29 = arith.constant 0.353553385 : f32
    %33 = vector.broadcast %cst_29 : f32 to vector<8x8xf32>
    %34 = arith.mulf %18, %33 : vector<8x8xf32>
    %35 = arith.truncf %34 : vector<8x8xf32> to vector<8x8xbf16>
    %36 = arith.truncf %25 : vector<8x8xf32> to vector<8x8xbf16>
    %cst_30 = arith.constant dense<0.000000e+00> : vector<8x8xf32>
    %37 = tpu.matmul %35, %36, %cst_30 {dimension_numbers = #tpu.dot_dimension_numbers<[1], [1], [0], [0], [0, 0, 1, 0], [], []>} : vector<8x8xbf16>, vector<8x8xbf16>, vector<8x8xf32> -> vector<8x8xf32>
    %cst_31 = arith.constant dense<0xFF800000> : vector<8xf32>
    %38 = vector.multi_reduction <maximumf>, %37, %cst_31 [1] : vector<8x8xf32> to vector<8xf32>
    %39 = vector.shape_cast %38 : vector<8xf32> to vector<8x1xf32>
    %40 = vector.broadcast %39 : vector<8x1xf32> to vector<8x8xf32>
    %41 = arith.subf %37, %40 : vector<8x8xf32>
    %42 = math.exp %41 : vector<8x8xf32>
    %cst_32 = arith.constant dense<0.000000e+00> : vector<8xf32>
    %43 = vector.multi_reduction <add>, %42, %cst_32 [1] : vector<8x8xf32> to vector<8xf32>
    %44 = vector.shape_cast %43 : vector<8xf32> to vector<8x1xf32>
    %45 = arith.truncf %42 : vector<8x8xf32> to vector<8x8xbf16>
    %46 = arith.truncf %32 : vector<8x8xf32> to vector<8x8xbf16>
    %cst_33 = arith.constant dense<0.000000e+00> : vector<8x8xf32>
    %47 = tpu.matmul %45, %46, %cst_33 {dimension_numbers = #tpu.dot_dimension_numbers<[1], [0], [0], [1], [0, 0, 1, 1], [], []>} : vector<8x8xbf16>, vector<8x8xbf16>, vector<8x8xf32> -> vector<8x8xf32>
    %48 = tpu.reciprocal %44 {approx = true} : vector<8x1xf32> -> vector<8x1xf32>
    %49 = vector.broadcast %48 : vector<8x1xf32> to vector<8x8xf32>
    %50 = arith.mulf %47, %49 : vector<8x8xf32>
    %c0_34 = arith.constant 0 : index
    %c0_35 = arith.constant 0 : index
    %51 = vector.load %arg14[%c0_34, %c0_35] : memref<8x32xf32, #tpu.memory_space<vmem>>, vector<8x32xf32>
    %52 = arith.truncf %50 : vector<8x8xf32> to vector<8x8xbf16>
    %c0_36 = arith.constant 0 : index
    %c0_37 = arith.constant 0 : index
    %c0_38 = arith.constant 0 : index
    %53 = vector.load %arg11[%c0_36, %c0_37, %c0_38] : memref<1x8x32xbf16, #tpu.memory_space<vmem>>, vector<1x8x32xbf16>
    %54 = vector.shape_cast %53 : vector<1x8x32xbf16> to vector<8x32xbf16>
    %cst_39 = arith.constant dense<0.000000e+00> : vector<8x32xf32>
    %55 = tpu.matmul %52, %54, %cst_39 {dimension_numbers = #tpu.dot_dimension_numbers<[1], [0], [0], [1], [0, 0, 1, 1], [], []>} : vector<8x8xbf16>, vector<8x32xbf16>, vector<8x32xf32> -> vector<8x32xf32>
    %56 = arith.addf %51, %55 : vector<8x32xf32>
    %c0_40 = arith.constant 0 : index
    %c0_41 = arith.constant 0 : index
    %57 = vector.load %arg14[%c0_40, %c0_41] : memref<8x32xf32, #tpu.memory_space<vmem>>, vector<8x32xf32>
    tpu.vector_store %arg14[%c0_40, %c0_41], %56 {strides = array<i32>} : memref<8x32xf32, #tpu.memory_space<vmem>>, vector<8x32xf32>,
    %c3_i32 = arith.constant 3 : i32
    %58 = arith.cmpi eq, %arg1, %c3_i32 : i32
    %59 = arith.extui %58 : i1 to i32
    %c0_i32_42 = arith.constant 0 : i32
    %60 = arith.cmpi ne, %59, %c0_i32_42 : i32
    scf.if %60 {
      %c0_43 = arith.constant 0 : index
      %c0_44 = arith.constant 0 : index
      %61 = vector.load %arg14[%c0_43, %c0_44] : memref<8x32xf32, #tpu.memory_space<vmem>>, vector<8x32xf32>
      %c0_45 = arith.constant 0 : index
      %c0_46 = arith.constant 0 : index
      %62 = vector.load %arg12[%c0_45, %c0_46] : memref<1x32xf32, #tpu.memory_space<vmem>>, vector<1x32xf32>
      %63 = vector.broadcast %62 : vector<1x32xf32> to vector<8x32xf32>
      %64 = arith.addf %61, %63 : vector<8x32xf32>
      %c0_47 = arith.constant 0 : index
      %c0_48 = arith.constant 0 : index
      %c0_49 = arith.constant 0 : index
      %65 = vector.load %arg13[%c0_47, %c0_48, %c0_49] : memref<1x8x32xf32, #tpu.memory_space<vmem>>, vector<1x8x32xf32>
      %66 = vector.shape_cast %65 : vector<1x8x32xf32> to vector<8x32xf32>
      %67 = vector.shape_cast %64 : vector<8x32xf32> to vector<1x8x32xf32>
      tpu.vector_store %arg13[%c0_47, %c0_48, %c0_49], %67 {strides = array<i32>} : memref<1x8x32xf32, #tpu.memory_space<vmem>>, vector<1x8x32xf32>,
    } else {
    }
    return
  }
  func.func @transform_0(%arg0: i32, %arg1: i32) -> (i32, i32, i32) {
    %c0_i32 = arith.constant 0 : i32
    %c0_i32_0 = arith.constant 0 : i32
    %c0_i32_1 = arith.constant 0 : i32
    return %arg0, %c0_i32, %c0_i32_0 : i32, i32, i32
  }
  func.func @transform_1(%arg0: i32, %arg1: i32) -> (i32, i32, i32) {
    %c0_i32 = arith.constant 0 : i32
    %c0_i32_0 = arith.constant 0 : i32
    %c0_i32_1 = arith.constant 0 : i32
    return %arg0, %c0_i32, %c0_i32_0 : i32, i32, i32
  }
  func.func @transform_2(%arg0: i32, %arg1: i32) -> (i32, i32, i32) {
    %c0_i32 = arith.constant 0 : i32
    %c0_i32_0 = arith.constant 0 : i32
    %c0_i32_1 = arith.constant 0 : i32
    return %arg0, %c0_i32, %c0_i32_0 : i32, i32, i32
  }
  func.func @transform_3(%arg0: i32, %arg1: i32) -> (i32, i32, i32) {
    %c0_i32 = arith.constant 0 : i32
    %c0_i32_0 = arith.constant 0 : i32
    %c0_i32_1 = arith.constant 0 : i32
    return %arg1, %c0_i32, %c0_i32_0 : i32, i32, i32
  }
  func.func @transform_4(%arg0: i32, %arg1: i32) -> (i32, i32, i32) {
    %c0_i32 = arith.constant 0 : i32
    %c0_i32_0 = arith.constant 0 : i32
    %c0_i32_1 = arith.constant 0 : i32
    return %arg1, %c0_i32, %c0_i32_0 : i32, i32, i32
  }
  func.func @transform_5(%arg0: i32, %arg1: i32) -> (i32, i32, i32) {
    %c0_i32 = arith.constant 0 : i32
    %c0_i32_0 = arith.constant 0 : i32
    %c0_i32_1 = arith.constant 0 : i32
    return %arg1, %c0_i32, %c0_i32_0 : i32, i32, i32
  }
  func.func @transform_6(%arg0: i32, %arg1: i32) -> (i32, i32, i32) {
    %c0_i32 = arith.constant 0 : i32
    %c0_i32_0 = arith.constant 0 : i32
    %c0_i32_1 = arith.constant 0 : i32
    return %arg1, %c0_i32, %c0_i32_0 : i32, i32, i32
  }
  func.func @transform_7(%arg0: i32, %arg1: i32) -> (i32, i32, i32) {
    %c0_i32 = arith.constant 0 : i32
    %c0_i32_0 = arith.constant 0 : i32
    %c0_i32_1 = arith.constant 0 : i32
    return %arg1, %c0_i32, %c0_i32_0 : i32, i32, i32
  }
  func.func @transform_8(%arg0: i32, %arg1: i32) -> (i32, i32, i32) {
    %c0_i32 = arith.constant 0 : i32
    %c0_i32_0 = arith.constant 0 : i32
    %c0_i32_1 = arith.constant 0 : i32
    return %arg1, %c0_i32, %c0_i32_0 : i32, i32, i32
  }
  func.func @transform_9(%arg0: i32, %arg1: i32) -> (i32, i32, i32) {
    %c0_i32 = arith.constant 0 : i32
    %c0_i32_0 = arith.constant 0 : i32
    %c0_i32_1 = arith.constant 0 : i32
    return %arg1, %c0_i32, %c0_i32_0 : i32, i32, i32
  }
  func.func @transform_10(%arg0: i32, %arg1: i32) -> (i32, i32) {
    %c0_i32 = arith.constant 0 : i32
    %c0_i32_0 = arith.constant 0 : i32
    %c0_i32_1 = arith.constant 0 : i32
    return %c0_i32, %c0_i32_0 : i32, i32
  }
  func.func @transform_11(%arg0: i32, %arg1: i32) -> (i32, i32, i32) {
    %c0_i32 = arith.constant 0 : i32
    %c0_i32_0 = arith.constant 0 : i32
    %c0_i32_1 = arith.constant 0 : i32
    return %arg0, %c0_i32, %c0_i32_0 : i32, i32, i32
  }
}

</mosaic_0001>

<llo_original>
// kernel: tpu_custom_call.1
$region0: #{tpu_custom_call.1}
  #allocation0 [shape = 'u32[]', space=smem, size = 0x4, offset = 0x4, fixed_abs, tag = 'smem constant byte address 0x4 - core index']
  #allocation1 [shape = 'u32[72,128]{1,0:T(1,128)}', space=vmem, size = 0x9000, scoped, tag = 'internal scratch']
  #allocation2 [shape = 'f32[8,32]{1,0:T(8,128)}', space=vmem, size = 0x1000, scoped, tag = 'scratch operand']
  %s0 = inlined_call_operand.vmem [shape: f32[2,8,32], index: 0, kind: input, shape index: {}]
  %s1 = inlined_call_operand.vmem [shape: f32[2,8,32], index: 1, kind: input, shape index: {}]
  %s2 = inlined_call_operand.vmem [shape: f32[2,8,32], index: 2, kind: input, shape index: {}]
  %s3 = inlined_call_operand.vmem [shape: bf16[4,32,8], index: 3, kind: input, shape index: {}]
  %s4 = inlined_call_operand.vmem [shape: f32[4,1,8], index: 4, kind: input, shape index: {}]
  %s5 = inlined_call_operand.vmem [shape: bf16[4,32,8], index: 5, kind: input, shape index: {}]
  %s6 = inlined_call_operand.vmem [shape: f32[4,1,8], index: 6, kind: input, shape index: {}]
  %s7 = inlined_call_operand.vmem [shape: bf16[4,32,8], index: 7, kind: input, shape index: {}]
  %s8 = inlined_call_operand.vmem [shape: f32[4,1,8], index: 8, kind: input, shape index: {}]
  %s9 = inlined_call_operand.vmem [shape: bf16[4,8,32], index: 9, kind: input, shape index: {}]
  %s10 = inlined_call_operand.vmem [shape: f32[1,32], index: 10, kind: input, shape index: {}]
  %s11 = inlined_call_operand.hbm [shape: f32[2,8,32], index: 11, kind: output, shape index: {}]
  %s12 = sld [smem:[#allocation0]]
  $region85: #{tpu_custom_call.1} parent=0
    _
  %s14 = ssub.s32 1, %s12
  %s15 = scalar_select 0, %s14, %s12
  $region1: #{tpu_custom_call.1} parent=0
    #allocation3 [shape = 'u8[8192]{0}', space=vmem, size = 0x2000, scoped, tag = 'output window, operand 0']
    #allocation4 [shape = 's32[2]{0}', space=sflag, size = 0x8, scoped, tag = 'scoped memory for tpu_custom_call.1']
    %16 = vsyncpa [#allocation4], 0
    %s17 = scalar_lea.sflag [#allocation4], 1
    %18 = vsyncpa %s17, 0
    loop: start=0, step=1, limit=10
    $region2: #{tpu_custom_call.1} parent=1 // loop_pre_header
      _
    $region3: #{tpu_custom_call.1} parent=1 // loop_header
      %s20 = sphi 0, %s24
      %p21 = scmp.ge.s32.totalorder %s20, 10
      %s27 = sphi 0, %s39
      %s28 = sphi 0, %s35
      %s29 = sphi 0, %s27
      %s30 = sphi 0, %s28
      %s31 = sphi 0, %s29
      %s32 = sphi 0, %s30
      %s42 = sphi 0, %s44
      %s45 = sphi 0, %s42
      %s46 = sphi 0, %s45
      %s62 = sphi 0, %s46
      %s68 = sphi 0, %s70
      %s71 = sphi 0, %s68
      %s72 = sphi 0, %s71
      %s88 = sphi 0, %s72
      %s94 = sphi 0, %s96
      %s97 = sphi 0, %s94
      %s98 = sphi 0, %s97
      %s114 = sphi 0, %s98
      %s120 = sphi 0, %s122
      %s123 = sphi 0, %s120
      %s124 = sphi 0, %s123
      %s140 = sphi 0, %s124
      %s146 = sphi 0, %s148
      %s149 = sphi 0, %s146
      %s150 = sphi 0, %s149
      %s166 = sphi 0, %s150
      %s172 = sphi 0, %s174
      %s175 = sphi 0, %s172
      %s176 = sphi 0, %s175
      %s192 = sphi 0, %s176
      %s198 = sphi 0, %s200
      %s201 = sphi 0, %s198
      %s202 = sphi 0, %s201
      %s218 = sphi 0, %s202
      %s224 = sphi 0, %s226
      %s227 = sphi 0, %s224
      %s228 = sphi 0, %s227
      %s244 = sphi 0, %s228
      %s250 = sphi 0, %s252
      %s253 = sphi 0, %s250
      %s254 = sphi 0, %s253
      %s270 = sphi 0, %s254
      %s276 = sphi 0, %s278
      %s279 = sphi 0, %s276
      %s280 = sphi 0, %s279
      %s296 = sphi 0, %s280
      %s300 = sphi 0, %s300
      %s302 = sphi 0, %s300
      %s303 = sphi 0, %s302
      %s317 = sphi 0, %s303
      %s323 = sphi 0, %s325
      %s326 = sphi 0, %s323
      %s327 = sphi 0, %s326
      %s343 = sphi 0, %s327
    $region4: #{tpu_custom_call.1} parent=1 // loop_header_branch
      %23 = sbr.rel (%p21) target = $region8
    $region5: #{tpu_custom_call.1} parent=1 // loop_body
      %s25 = ssub.s32 %s20, 1
      %s26 = ssub.s32 %s20, 2
      %s33 = sadd.s32 1, %s28
      %p34 = scmp.ge.s32.totalorder %s33, 4
      %s35 = scalar_select %p34, 0, %s33
      %s36 = sadd.s32 1, %s27
      %s37 = scalar_select %p34, %s36, %s27
      %p38 = scmp.ge.s32.totalorder %s37, 2
      %s39 = scalar_select %p38, 0, %s37
      %s40 = ssub.s32 %s27, %s39
      %p41 = scmp.eq.s32.totalorder %s40, 0
      %s43 = sadd.s32 %s42, 1
      %s44 = scalar_select %p41, %s42, %s43
      %p47 = pneg %p41
      %p48 = scmp.eq.s32.totalorder %s20, 7
      %p49 = por %p47, %p48
      %p50 = scmp.ne.s32.totalorder %s42, %s45
      %p51 = scmp.eq.s32.totalorder %s20, 0
      %p52 = por %p50, %p51
      %p53 = scmp.ne.s32.totalorder %s42, %s45
      %p54 = scmp.eq.s32.totalorder %s25, 7
      %p55 = por %p53, %p54
      %p56 = scmp.ne.s32.totalorder %s45, %s46
      %p57 = scmp.eq.s32.totalorder %s25, 0
      %p58 = por %p56, %p57
      %p59 = scmp.ne.s32.totalorder %s45, %s46
      %p60 = scmp.eq.s32.totalorder %s26, 7
      %p61 = por %p59, %p60
      %p63 = scmp.ne.s32.totalorder %s46, %s62
      %p64 = scmp.eq.s32.totalorder %s26, 0
      %p65 = por %p63, %p64
      %s66 = ssub.s32 %s27, %s39
      %p67 = scmp.eq.s32.totalorder %s66, 0
      %s69 = sadd.s32 %s68, 1
      %s70 = scalar_select %p67, %s68, %s69
      %p73 = pneg %p67
      %p74 = scmp.eq.s32.totalorder %s20, 7
      %p75 = por %p73, %p74
      %p76 = scmp.ne.s32.totalorder %s68, %s71
      %p77 = scmp.eq.s32.totalorder %s20, 0
      %p78 = por %p76, %p77
      %p79 = scmp.ne.s32.totalorder %s68, %s71
      %p80 = scmp.eq.s32.totalorder %s25, 7
      %p81 = por %p79, %p80
      %p82 = scmp.ne.s32.totalorder %s71, %s72
      %p83 = scmp.eq.s32.totalorder %s25, 0
      %p84 = por %p82, %p83
      %p85 = scmp.ne.s32.totalorder %s71, %s72
      %p86 = scmp.eq.s32.totalorder %s26, 7
      %p87 = por %p85, %p86
      %p89 = scmp.ne.s32.totalorder %s72, %s88
      %p90 = scmp.eq.s32.totalorder %s26, 0
      %p91 = por %p89, %p90
      %s92 = ssub.s32 %s27, %s39
      %p93 = scmp.eq.s32.totalorder %s92, 0
      %s95 = sadd.s32 %s94, 1
      %s96 = scalar_select %p93, %s94, %s95
      %p99 = pneg %p93
      %p100 = scmp.eq.s32.totalorder %s20, 7
      %p101 = por %p99, %p100
      %p102 = scmp.ne.s32.totalorder %s94, %s97
      %p103 = scmp.eq.s32.totalorder %s20, 0
      %p104 = por %p102, %p103
      %p105 = scmp.ne.s32.totalorder %s94, %s97
      %p106 = scmp.eq.s32.totalorder %s25, 7
      %p107 = por %p105, %p106
      %p108 = scmp.ne.s32.totalorder %s97, %s98
      %p109 = scmp.eq.s32.totalorder %s25, 0
      %p110 = por %p108, %p109
      %p111 = scmp.ne.s32.totalorder %s97, %s98
      %p112 = scmp.eq.s32.totalorder %s26, 7
      %p113 = por %p111, %p112
      %p115 = scmp.ne.s32.totalorder %s98, %s114
      %p116 = scmp.eq.s32.totalorder %s26, 0
      %p117 = por %p115, %p116
      %s118 = ssub.s32 %s28, %s35
      %p119 = scmp.eq.s32.totalorder %s118, 0
      %s121 = sadd.s32 %s120, 1
      %s122 = scalar_select %p119, %s120, %s121
      %p125 = pneg %p119
      %p126 = scmp.eq.s32.totalorder %s20, 7
      %p127 = por %p125, %p126
      %p128 = scmp.ne.s32.totalorder %s120, %s123
      %p129 = scmp.eq.s32.totalorder %s20, 0
      %p130 = por %p128, %p129
      %p131 = scmp.ne.s32.totalorder %s120, %s123
      %p132 = scmp.eq.s32.totalorder %s25, 7
      %p133 = por %p131, %p132
      %p134 = scmp.ne.s32.totalorder %s123, %s124
      %p135 = scmp.eq.s32.totalorder %s25, 0
      %p136 = por %p134, %p135
      %p137 = scmp.ne.s32.totalorder %s123, %s124
      %p138 = scmp.eq.s32.totalorder %s26, 7
      %p139 = por %p137, %p138
      %p141 = scmp.ne.s32.totalorder %s124, %s140
      %p142 = scmp.eq.s32.totalorder %s26, 0
      %p143 = por %p141, %p142
      %s144 = ssub.s32 %s28, %s35
      %p145 = scmp.eq.s32.totalorder %s144, 0
      %s147 = sadd.s32 %s146, 1
      %s148 = scalar_select %p145, %s146, %s147
      %p151 = pneg %p145
      %p152 = scmp.eq.s32.totalorder %s20, 7
      %p153 = por %p151, %p152
      %p154 = scmp.ne.s32.totalorder %s146, %s149
      %p155 = scmp.eq.s32.totalorder %s20, 0
      %p156 = por %p154, %p155
      %p157 = scmp.ne.s32.totalorder %s146, %s149
      %p158 = scmp.eq.s32.totalorder %s25, 7
      %p159 = por %p157, %p158
      %p160 = scmp.ne.s32.totalorder %s149, %s150
      %p161 = scmp.eq.s32.totalorder %s25, 0
      %p162 = por %p160, %p161
      %p163 = scmp.ne.s32.totalorder %s149, %s150
      %p164 = scmp.eq.s32.totalorder %s26, 7
      %p165 = por %p163, %p164
      %p167 = scmp.ne.s32.totalorder %s150, %s166
      %p168 = scmp.eq.s32.totalorder %s26, 0
      %p169 = por %p167, %p168
      %s170 = ssub.s32 %s28, %s35
      %p171 = scmp.eq.s32.totalorder %s170, 0
      %s173 = sadd.s32 %s172, 1
      %s174 = scalar_select %p171, %s172, %s173
      %p177 = pneg %p171
      %p178 = scmp.eq.s32.totalorder %s20, 7
      %p179 = por %p177, %p178
      %p180 = scmp.ne.s32.totalorder %s172, %s175
      %p181 = scmp.eq.s32.totalorder %s20, 0
      %p182 = por %p180, %p181
      %p183 = scmp.ne.s32.totalorder %s172, %s175
      %p184 = scmp.eq.s32.totalorder %s25, 7
      %p185 = por %p183, %p184
      %p186 = scmp.ne.s32.totalorder %s175, %s176
      %p187 = scmp.eq.s32.totalorder %s25, 0
      %p188 = por %p186, %p187
      %p189 = scmp.ne.s32.totalorder %s175, %s176
      %p190 = scmp.eq.s32.totalorder %s26, 7
      %p191 = por %p189, %p190
      %p193 = scmp.ne.s32.totalorder %s176, %s192
      %p194 = scmp.eq.s32.totalorder %s26, 0
      %p195 = por %p193, %p194
      %s196 = ssub.s32 %s28, %s35
      %p197 = scmp.eq.s32.totalorder %s196, 0
      %s199 = sadd.s32 %s198, 1
      %s200 = scalar_select %p197, %s198, %s199
      %p203 = pneg %p197
      %p204 = scmp.eq.s32.totalorder %s20, 7
      %p205 = por %p203, %p204
      %p206 = scmp.ne.s32.totalorder %s198, %s201
      %p207 = scmp.eq.s32.totalorder %s20, 0
      %p208 = por %p206, %p207
      %p209 = scmp.ne.s32.totalorder %s198, %s201
      %p210 = scmp.eq.s32.totalorder %s25, 7
      %p211 = por %p209, %p210
      %p212 = scmp.ne.s32.totalorder %s201, %s202
      %p213 = scmp.eq.s32.totalorder %s25, 0
      %p214 = por %p212, %p213
      %p215 = scmp.ne.s32.totalorder %s201, %s202
      %p216 = scmp.eq.s32.totalorder %s26, 7
      %p217 = por %p215, %p216
      %p219 = scmp.ne.s32.totalorder %s202, %s218
      %p220 = scmp.eq.s32.totalorder %s26, 0
      %p221 = por %p219, %p220
      %s222 = ssub.s32 %s28, %s35
      %p223 = scmp.eq.s32.totalorder %s222, 0
      %s225 = sadd.s32 %s224, 1
      %s226 = scalar_select %p223, %s224, %s225
      %p229 = pneg %p223
      %p230 = scmp.eq.s32.totalorder %s20, 7
      %p231 = por %p229, %p230
      %p232 = scmp.ne.s32.totalorder %s224, %s227
      %p233 = scmp.eq.s32.totalorder %s20, 0
      %p234 = por %p232, %p233
      %p235 = scmp.ne.s32.totalorder %s224, %s227
      %p236 = scmp.eq.s32.totalorder %s25, 7
      %p237 = por %p235, %p236
      %p238 = scmp.ne.s32.totalorder %s227, %s228
      %p239 = scmp.eq.s32.totalorder %s25, 0
      %p240 = por %p238, %p239
      %p241 = scmp.ne.s32.totalorder %s227, %s228
      %p242 = scmp.eq.s32.totalorder %s26, 7
      %p243 = por %p241, %p242
      %p245 = scmp.ne.s32.totalorder %s228, %s244
      %p246 = scmp.eq.s32.totalorder %s26, 0
      %p247 = por %p245, %p246
      %s248 = ssub.s32 %s28, %s35
      %p249 = scmp.eq.s32.totalorder %s248, 0
      %s251 = sadd.s32 %s250, 1
      %s252 = scalar_select %p249, %s250, %s251
      %p255 = pneg %p249
      %p256 = scmp.eq.s32.totalorder %s20, 7
      %p257 = por %p255, %p256
      %p258 = scmp.ne.s32.totalorder %s250, %s253
      %p259 = scmp.eq.s32.totalorder %s20, 0
      %p260 = por %p258, %p259
      %p261 = scmp.ne.s32.totalorder %s250, %s253
      %p262 = scmp.eq.s32.totalorder %s25, 7
      %p263 = por %p261, %p262
      %p264 = scmp.ne.s32.totalorder %s253, %s254
      %p265 = scmp.eq.s32.totalorder %s25, 0
      %p266 = por %p264, %p265
      %p267 = scmp.ne.s32.totalorder %s253, %s254
      %p268 = scmp.eq.s32.totalorder %s26, 7
      %p269 = por %p267, %p268
      %p271 = scmp.ne.s32.totalorder %s254, %s270
      %p272 = scmp.eq.s32.totalorder %s26, 0
      %p273 = por %p271, %p272
      %s274 = ssub.s32 %s28, %s35
      %p275 = scmp.eq.s32.totalorder %s274, 0
      %s277 = sadd.s32 %s276, 1
      %s278 = scalar_select %p275, %s276, %s277
      %p281 = pneg %p275
      %p282 = scmp.eq.s32.totalorder %s20, 7
      %p283 = por %p281, %p282
      %p284 = scmp.ne.s32.totalorder %s276, %s279
      %p285 = scmp.eq.s32.totalorder %s20, 0
      %p286 = por %p284, %p285
      %p287 = scmp.ne.s32.totalorder %s276, %s279
      %p288 = scmp.eq.s32.totalorder %s25, 7
      %p289 = por %p287, %p288
      %p290 = scmp.ne.s32.totalorder %s279, %s280
      %p291 = scmp.eq.s32.totalorder %s25, 0
      %p292 = por %p290, %p291
      %p293 = scmp.ne.s32.totalorder %s279, %s280
      %p294 = scmp.eq.s32.totalorder %s26, 7
      %p295 = por %p293, %p294
      %p297 = scmp.ne.s32.totalorder %s280, %s296
      %p298 = scmp.eq.s32.totalorder %s26, 0
      %p299 = por %p297, %p298
      %s301 = sadd.s32 %s300, 1
      %p304 = scmp.eq.s32.totalorder %s20, 7
      %p305 = scmp.ne.s32.totalorder %s300, %s302
      %p306 = scmp.eq.s32.totalorder %s20, 0
      %p307 = por %p305, %p306
      %p308 = scmp.ne.s32.totalorder %s300, %s302
      %p309 = scmp.eq.s32.totalorder %s25, 7
      %p310 = por %p308, %p309
      %p311 = scmp.ne.s32.totalorder %s302, %s303
      %p312 = scmp.eq.s32.totalorder %s25, 0
      %p313 = por %p311, %p312
      %p314 = scmp.ne.s32.totalorder %s302, %s303
      %p315 = scmp.eq.s32.totalorder %s26, 7
      %p316 = por %p314, %p315
      %p318 = scmp.ne.s32.totalorder %s303, %s317
      %p319 = scmp.eq.s32.totalorder %s26, 0
      %p320 = por %p318, %p319
      %s321 = ssub.s32 %s27, %s39
      %p322 = scmp.eq.s32.totalorder %s321, 0
      %s324 = sadd.s32 %s323, 1
      %s325 = scalar_select %p322, %s323, %s324
      %p328 = pneg %p322
      %p329 = scmp.eq.s32.totalorder %s20, 7
      %p330 = por %p328, %p329
      %p331 = scmp.ne.s32.totalorder %s323, %s326
      %p332 = scmp.eq.s32.totalorder %s20, 0
      %p333 = por %p331, %p332
      %p334 = scmp.ne.s32.totalorder %s323, %s326
      %p335 = scmp.eq.s32.totalorder %s25, 7
      %p336 = por %p334, %p335
      %p337 = scmp.ne.s32.totalorder %s326, %s327
      %p338 = scmp.eq.s32.totalorder %s25, 0
      %p339 = por %p337, %p338
      %p340 = scmp.ne.s32.totalorder %s326, %s327
      %p341 = scmp.eq.s32.totalorder %s26, 7
      %p342 = por %p340, %p341
      %p344 = scmp.ne.s32.totalorder %s327, %s343
      %p345 = scmp.eq.s32.totalorder %s26, 0
      %p346 = por %p344, %p345
      %p347 = scmp.le.s32.totalorder 1, %s20
      %p348 = scmp.lt.s32.totalorder %s20, 9
      %p349 = pnand %p347, %p348
      %p350 = pneg %p349
      // Predicated region
      $region9: #{tpu_custom_call.1} parent=5 // pred_check
        _
      $region10: #{tpu_custom_call.1} parent=5 // pred_check_branch
        %352 = sbr.rel (%p349) target = $region12
      $region11: #{tpu_custom_call.1} parent=5 // pred_region
        %s353 = ssub.s32 %s20, 1
        // Predicated region
        $region13: #{tpu_custom_call.1} parent=11 // pred_check
          %p354 = pneg %p313
        $region14: #{tpu_custom_call.1} parent=11 // pred_check_branch
          %356 = sbr.rel (%p354) target = $region16
        $region15: #{tpu_custom_call.1} parent=11 // pred_region
          _
        $region16: #{tpu_custom_call.1} parent=11 // pred_fallthru
          _
      $region12: #{tpu_custom_call.1} parent=5 // pred_fallthru
        _
      %p357 = scmp.lt.s32.totalorder %s20, 8
      // Predicated region
      $region17: #{tpu_custom_call.1} parent=5 // pred_check
        %p358 = pneg %p357
      $region18: #{tpu_custom_call.1} parent=5 // pred_check_branch
        %360 = sbr.rel (%p358) target = $region20
      $region19: #{tpu_custom_call.1} parent=5 // pred_region
        // Predicated region
        $region21: #{tpu_custom_call.1} parent=19 // pred_check
          %p361 = pneg %p52
        $region22: #{tpu_custom_call.1} parent=19 // pred_check_branch
          %363 = sbr.rel (%p361) target = $region24
        $region23: #{tpu_custom_call.1} parent=19 // pred_region
          %p364 = scmp.lt.s32.totalorder %s27, 1
          %s365 = scalar_select %p364, %s27, 1
          %s366 = smul.addr %s365, 8
          %s367 = scalar_lea.vmem %s0, %s366
        $region24: #{tpu_custom_call.1} parent=19 // pred_fallthru
          _
        // Predicated region
        $region25: #{tpu_custom_call.1} parent=19 // pred_check
          %p368 = pneg %p78
        $region26: #{tpu_custom_call.1} parent=19 // pred_check_branch
          %370 = sbr.rel (%p368) target = $region28
        $region27: #{tpu_custom_call.1} parent=19 // pred_region
          %p371 = scmp.lt.s32.totalorder %s27, 1
          %s372 = scalar_select %p371, %s27, 1
          %s373 = smul.addr %s372, 8
          %s374 = scalar_lea.vmem %s1, %s373
        $region28: #{tpu_custom_call.1} parent=19 // pred_fallthru
          _
        // Predicated region
        $region29: #{tpu_custom_call.1} parent=19 // pred_check
          %p375 = pneg %p104
        $region30: #{tpu_custom_call.1} parent=19 // pred_check_branch
          %377 = sbr.rel (%p375) target = $region32
        $region31: #{tpu_custom_call.1} parent=19 // pred_region
          %p378 = scmp.lt.s32.totalorder %s27, 1
          %s379 = scalar_select %p378, %s27, 1
          %s380 = smul.addr %s379, 8
          %s381 = scalar_lea.vmem %s2, %s380
        $region32: #{tpu_custom_call.1} parent=19 // pred_fallthru
          _
        // Predicated region
        $region33: #{tpu_custom_call.1} parent=19 // pred_check
          %p382 = pneg %p130
        $region34: #{tpu_custom_call.1} parent=19 // pred_check_branch
          %384 = sbr.rel (%p382) target = $region36
        $region35: #{tpu_custom_call.1} parent=19 // pred_region
          %p385 = scmp.lt.s32.totalorder %s28, 3
          %s386 = scalar_select %p385, %s28, 3
          %s387 = smul.addr %s386, 4
          %s388 = smul.addr %s387, 4
          %s389 = scalar_lea.vmem %s3, %s388
        $region36: #{tpu_custom_call.1} parent=19 // pred_fallthru
          _
        // Predicated region
        $region37: #{tpu_custom_call.1} parent=19 // pred_check
          %p390 = pneg %p156
        $region38: #{tpu_custom_call.1} parent=19 // pred_check_branch
          %392 = sbr.rel (%p390) target = $region40
        $region39: #{tpu_custom_call.1} parent=19 // pred_region
          %p393 = scmp.lt.s32.totalorder %s28, 3
          %s394 = scalar_select %p393, %s28, 3
          %s395 = scalar_lea.vmem %s4, %s394
        $region40: #{tpu_custom_call.1} parent=19 // pred_fallthru
          _
        // Predicated region
        $region41: #{tpu_custom_call.1} parent=19 // pred_check
          %p396 = pneg %p182
        $region42: #{tpu_custom_call.1} parent=19 // pred_check_branch
          %398 = sbr.rel (%p396) target = $region44
        $region43: #{tpu_custom_call.1} parent=19 // pred_region
          %p399 = scmp.lt.s32.totalorder %s28, 3
          %s400 = scalar_select %p399, %s28, 3
          %s401 = smul.addr %s400, 4
          %s402 = smul.addr %s401, 4
          %s403 = scalar_lea.vmem %s5, %s402
        $region44: #{tpu_custom_call.1} parent=19 // pred_fallthru
          _
        // Predicated region
        $region45: #{tpu_custom_call.1} parent=19 // pred_check
          %p404 = pneg %p208
        $region46: #{tpu_custom_call.1} parent=19 // pred_check_branch
          %406 = sbr.rel (%p404) target = $region48
        $region47: #{tpu_custom_call.1} parent=19 // pred_region
          %p407 = scmp.lt.s32.totalorder %s28, 3
          %s408 = scalar_select %p407, %s28, 3
          %s409 = scalar_lea.vmem %s6, %s408
        $region48: #{tpu_custom_call.1} parent=19 // pred_fallthru
          _
        // Predicated region
        $region49: #{tpu_custom_call.1} parent=19 // pred_check
          %p410 = pneg %p234
        $region50: #{tpu_custom_call.1} parent=19 // pred_check_branch
          %412 = sbr.rel (%p410) target = $region52
        $region51: #{tpu_custom_call.1} parent=19 // pred_region
          %p413 = scmp.lt.s32.totalorder %s28, 3
          %s414 = scalar_select %p413, %s28, 3
          %s415 = smul.addr %s414, 4
          %s416 = smul.addr %s415, 4
          %s417 = scalar_lea.vmem %s7, %s416
        $region52: #{tpu_custom_call.1} parent=19 // pred_fallthru
          _
        // Predicated region
        $region53: #{tpu_custom_call.1} parent=19 // pred_check
          %p418 = pneg %p260
        $region54: #{tpu_custom_call.1} parent=19 // pred_check_branch
          %420 = sbr.rel (%p418) target = $region56
        $region55: #{tpu_custom_call.1} parent=19 // pred_region
          %p421 = scmp.lt.s32.totalorder %s28, 3
          %s422 = scalar_select %p421, %s28, 3
          %s423 = scalar_lea.vmem %s8, %s422
        $region56: #{tpu_custom_call.1} parent=19 // pred_fallthru
          _
        // Predicated region
        $region57: #{tpu_custom_call.1} parent=19 // pred_check
          %p424 = pneg %p286
        $region58: #{tpu_custom_call.1} parent=19 // pred_check_branch
          %426 = sbr.rel (%p424) target = $region60
        $region59: #{tpu_custom_call.1} parent=19 // pred_region
          %p427 = scmp.lt.s32.totalorder %s28, 3
          %s428 = scalar_select %p427, %s28, 3
          %s429 = smul.addr %s428, 4
          %s430 = scalar_lea.vmem %s9, %s429
        $region60: #{tpu_custom_call.1} parent=19 // pred_fallthru
          _
      $region20: #{tpu_custom_call.1} parent=5 // pred_fallthru
        _
      %p431 = scmp.le.s32.totalorder 1, %s20
      %p432 = scmp.lt.s32.totalorder %s20, 9
      %p433 = pnand %p431, %p432
      %p434 = pneg %p433
      // Predicated region
      $region61: #{tpu_custom_call.1} parent=5 // pred_check
        _
      $region62: #{tpu_custom_call.1} parent=5 // pred_check_branch
        %436 = sbr.rel (%p433) target = $region64
      $region63: #{tpu_custom_call.1} parent=5 // pred_region
        %s437 = ssub.s32 %s20, 1
        %p438 = scmp.lt.s32.totalorder %s29, 1
        %s439 = scalar_select %p438, %s29, 1
        %s440 = smul.addr %s439, 8
        %s441 = scalar_lea.vmem %s0, %s440
        %p442 = pneg %p58
        %p443 = pneg %p55
        %p444 = scmp.lt.s32.totalorder %s29, 1
        %s445 = scalar_select %p444, %s29, 1
        %s446 = smul.addr %s445, 8
        %s447 = scalar_lea.vmem %s1, %s446
        %p448 = pneg %p84
        %p449 = pneg %p81
        %p450 = scmp.lt.s32.totalorder %s29, 1
        %s451 = scalar_select %p450, %s29, 1
        %s452 = smul.addr %s451, 8
        %s453 = scalar_lea.vmem %s2, %s452
        %p454 = pneg %p110
        %p455 = pneg %p107
        %p456 = scmp.lt.s32.totalorder %s30, 3
        %s457 = scalar_select %p456, %s30, 3
        %s458 = smul.addr %s457, 4
        %s459 = smul.addr %s458, 4
        %s460 = scalar_lea.vmem %s3, %s459
        %p461 = pneg %p136
        %p462 = pneg %p133
        %p463 = scmp.lt.s32.totalorder %s30, 3
        %s464 = scalar_select %p463, %s30, 3
        %s465 = scalar_lea.vmem %s4, %s464
        %p466 = pneg %p162
        %p467 = pneg %p159
        %p468 = scmp.lt.s32.totalorder %s30, 3
        %s469 = scalar_select %p468, %s30, 3
        %s470 = smul.addr %s469, 4
        %s471 = smul.addr %s470, 4
        %s472 = scalar_lea.vmem %s5, %s471
        %p473 = pneg %p188
        %p474 = pneg %p185
        %p475 = scmp.lt.s32.totalorder %s30, 3
        %s476 = scalar_select %p475, %s30, 3
        %s477 = scalar_lea.vmem %s6, %s476
        %p478 = pneg %p214
        %p479 = pneg %p211
        %p480 = scmp.lt.s32.totalorder %s30, 3
        %s481 = scalar_select %p480, %s30, 3
        %s482 = smul.addr %s481, 4
        %s483 = smul.addr %s482, 4
        %s484 = scalar_lea.vmem %s7, %s483
        %p485 = pneg %p240
        %p486 = pneg %p237
        %p487 = scmp.lt.s32.totalorder %s30, 3
        %s488 = scalar_select %p487, %s30, 3
        %s489 = scalar_lea.vmem %s8, %s488
        %p490 = pneg %p266
        %p491 = pneg %p263
        %p492 = scmp.lt.s32.totalorder %s30, 3
        %s493 = scalar_select %p492, %s30, 3
        %s494 = smul.addr %s493, 4
        %s495 = scalar_lea.vmem %s9, %s494
        %p496 = pneg %p292
        %p497 = pneg %p289
        %p498 = pneg %p313
        %p499 = pneg %p310
        %p500 = pneg %p339
        %p501 = pneg %p336
        %s502 = sand.u32 %s326, 1
        %s503 = scalar_lea.sflag [#allocation4], %s502
        %s504 = sand.u32 %s326, 1
        %s505 = smul.addr %s504, 8
        %s506 = scalar_lea.vmem [#allocation3], %s505
        %p507 = scmp.lt.s32.totalorder %s29, 1
        %s508 = scalar_select %p507, %s29, 1
        %s509 = smul.addr %s508, 8
        %s510 = scalar_lea.vmem %s0, %s509
        %p511 = scmp.lt.s32.totalorder %s29, 1
        %s512 = scalar_select %p511, %s29, 1
        %s513 = smul.addr %s512, 8
        %s514 = scalar_lea.vmem %s1, %s513
        %p515 = scmp.lt.s32.totalorder %s29, 1
        %s516 = scalar_select %p515, %s29, 1
        %s517 = smul.addr %s516, 8
        %s518 = scalar_lea.vmem %s2, %s517
        %p519 = scmp.lt.s32.totalorder %s30, 3
        %s520 = scalar_select %p519, %s30, 3
        %s521 = smul.addr %s520, 4
        %s522 = smul.addr %s521, 4
        %s523 = scalar_lea.vmem %s3, %s522
        %p524 = scmp.lt.s32.totalorder %s30, 3
        %s525 = scalar_select %p524, %s30, 3
        %s526 = scalar_lea.vmem %s4, %s525
        %p527 = scmp.lt.s32.totalorder %s30, 3
        %s528 = scalar_select %p527, %s30, 3
        %s529 = smul.addr %s528, 4
        %s530 = smul.addr %s529, 4
        %s531 = scalar_lea.vmem %s5, %s530
        %p532 = scmp.lt.s32.totalorder %s30, 3
        %s533 = scalar_select %p532, %s30, 3
        %s534 = scalar_lea.vmem %s6, %s533
        %p535 = scmp.lt.s32.totalorder %s30, 3
        %s536 = scalar_select %p535, %s30, 3
        %s537 = smul.addr %s536, 4
        %s538 = smul.addr %s537, 4
        %s539 = scalar_lea.vmem %s7, %s538
        %p540 = scmp.lt.s32.totalorder %s30, 3
        %s541 = scalar_select %p540, %s30, 3
        %s542 = scalar_lea.vmem %s8, %s541
        %p543 = scmp.lt.s32.totalorder %s30, 3
        %s544 = scalar_select %p543, %s30, 3
        %s545 = smul.addr %s544, 4
        %s546 = scalar_lea.vmem %s9, %s545
        %p548 = scmp.eq.s32.totalorder %s30, 0
        // Predicated region
        $region65: #{tpu_custom_call.1} parent=63 // pred_check
          %p549 = pneg %p548
        $region66: #{tpu_custom_call.1} parent=63 // pred_check_branch
          %551 = sbr.rel (%p549) target = $region68
        $region67: #{tpu_custom_call.1} parent=63 // pred_region
          %vm552 = vcmask 261120
          %553 = vst.msk [vmem:[#allocation2] sm:$0xff] %vm552, 0.0
        $region68: #{tpu_custom_call.1} parent=63 // pred_fallthru
          _
        %v554 = vld [vmem:[%s510] sm:$0xff]
        %v555 = vpack.c.bf16 %v554, %v554
        %v556 = vld [vmem:[%s514] sm:$0xff]
        %v557 = vpack.c.bf16 %v556, %v556
        %v558 = vld [vmem:[%s518] sm:$0xff]
        %v559 = vpack.c.bf16 %v558, %v558
        %v560 = vld [vmem:[%s523] sm:$0xf]
        %v561 = vld [vmem:[%s523 + $0x4] sm:$0xf]
        %v562 = vld [vmem:[%s523 + $0x8] sm:$0xf]
        %v563 = vld [vmem:[%s523 + $0xc] sm:$0xf]
        %v564 = vld [vmem:[%s526] sm:$0x1]
        %v566 = vperm.slane %v564, 0
        %v572 = vunpack.c.l.b16 %v560
        %v573 = vunpack.c.l.b16 %v561
        %v574 = vunpack.c.l.b16 %v562
        %v575 = vunpack.c.l.b16 %v563
        %v576 = vpack.c.b16 %v573, %v572
        %v577 = vpack.c.b16 %v575, %v574
        %vm580 = vcmask 261120
        %v582 = vsel %vm580, %v555, 0
        %584 = vmatpush.bf16.msra.mxu0 0
        %585 = vmatpush.bf16.msra.mxu0 0
        %586 = vmatpush.bf16.msra.mxu0 0
        %587 = vmatpush.bf16.msra.mxu0 0
        %588 = vmatpush.bf16.msra.mxu0 0
        %589 = vmatpush.bf16.msra.mxu0 0
        %590 = vmatpush.bf16.msra.mxu0 %v577
        %591 = vmatpush.bf16.msra.mxu0 %v576
        %592 = vmatmul.bf16.gmra.mxu0 %v582
        %v593 = vpop.f32.mrf.mxu0
        %v594 = vadd.f32 %v566, %v593
        %v595 = vpop.f32.mrf.mxu0
        %596 = vdwg.mxu0
        %v597 = vld [vmem:[%s531] sm:$0xf]
        %v598 = vld [vmem:[%s531 + $0x4] sm:$0xf]
        %v599 = vld [vmem:[%s531 + $0x8] sm:$0xf]
        %v600 = vld [vmem:[%s531 + $0xc] sm:$0xf]
        %v601 = vld [vmem:[%s534] sm:$0x1]
        %v603 = vperm.slane %v601, 0
        %v609 = vunpack.c.l.b16 %v597
        %v610 = vunpack.c.l.b16 %v598
        %v611 = vunpack.c.l.b16 %v599
        %v612 = vunpack.c.l.b16 %v600
        %v613 = vpack.c.b16 %v610, %v609
        %v614 = vpack.c.b16 %v612, %v611
        %v618 = vsel %vm580, %v557, 0
        %620 = vmatpush.bf16.msra.mxu0 0
        %621 = vmatpush.bf16.msra.mxu0 0
        %622 = vmatpush.bf16.msra.mxu0 0
        %623 = vmatpush.bf16.msra.mxu0 0
        %624 = vmatpush.bf16.msra.mxu0 0
        %625 = vmatpush.bf16.msra.mxu0 0
        %626 = vmatpush.bf16.msra.mxu0 %v614
        %627 = vmatpush.bf16.msra.mxu0 %v613
        %628 = vmatmul.bf16.gmra.mxu0 %v618
        %v629 = vpop.f32.mrf.mxu0
        %v630 = vadd.f32 %v603, %v629
        %v631 = vpop.f32.mrf.mxu0
        %632 = vdwg.mxu0
        %v633 = vld [vmem:[%s539] sm:$0xf]
        %v634 = vld [vmem:[%s539 + $0x4] sm:$0xf]
        %v635 = vld [vmem:[%s539 + $0x8] sm:$0xf]
        %v636 = vld [vmem:[%s539 + $0xc] sm:$0xf]
        %v637 = vld [vmem:[%s542] sm:$0x1]
        %v639 = vperm.slane %v637, 0
        %v645 = vunpack.c.l.b16 %v633
        %v646 = vunpack.c.l.b16 %v634
        %v647 = vunpack.c.l.b16 %v635
        %v648 = vunpack.c.l.b16 %v636
        %v649 = vpack.c.b16 %v646, %v645
        %v650 = vpack.c.b16 %v648, %v647
        %v654 = vsel %vm580, %v559, 0
        %656 = vmatpush.bf16.msra.mxu0 0
        %657 = vmatpush.bf16.msra.mxu0 0
        %658 = vmatpush.bf16.msra.mxu0 0
        %659 = vmatpush.bf16.msra.mxu0 0
        %660 = vmatpush.bf16.msra.mxu0 0
        %661 = vmatpush.bf16.msra.mxu0 0
        %662 = vmatpush.bf16.msra.mxu0 %v650
        %663 = vmatpush.bf16.msra.mxu0 %v649
        %664 = vmatmul.bf16.gmra.mxu0 %v654
        %v665 = vpop.f32.mrf.mxu0
        %v666 = vadd.f32 %v639, %v665
        %v667 = vpop.f32.mrf.mxu0
        %668 = vdwg.mxu0
        %v669 = vmul.f32 %v594, 0.35355338
        %v670 = vpack.c.bf16 %v669, %v669
        %v671 = vpack.c.bf16 %v630, %v630
        %vm672 = vcmask 64512
        %v674 = vsel %vm672, %v670, 0
        %v677 = vsel %vm672, %v671, 0
        %679 = vmatpush.bf16.xpose.msra.mxu0 0
        %680 = vmatpush.bf16.xpose.msra.mxu0 0
        %681 = vmatpush.bf16.xpose.msra.mxu0 0
        %682 = vmatpush.bf16.xpose.msra.mxu0 0
        %683 = vmatpush.bf16.xpose.msra.mxu0 0
        %684 = vmatpush.bf16.xpose.msra.mxu0 0
        %685 = vmatpush.bf16.xpose.msra.mxu0 0
        %686 = vmatpush.bf16.xpose.msra.mxu0 %v677
        %687 = vmatmul.bf16.gmra.mxu0 %v674
        %v688 = vpop.f32.mrf.mxu0
        %v689 = vadd.f32 0.0, %v688
        %v690 = vpop.f32.mrf.mxu0
        %691 = vdwg.mxu0
        %v692 = vsel %vm672, %v689, -inf
        %693 = vmax.xlane.f32.xlu0 %v692
        %v694 = vpop.xlane.xlu0 %693
        %v695 = vsub.f32 %v689, %v694
        %v696 = vmul.f32 %v695, 1.442695
        %v697 = vpow.pop %v696
        %v698 = vsel %vm672, %v697, 0.0
        %699 = vadd.xlane.f32.xlu0 %v698
        %v700 = vpop.xlane.xlu0 %699
        %v701 = vpack.c.bf16 %v697, %v697
        %v702 = vpack.c.bf16 %v666, %v666
        %v704 = vsel %vm672, %v701, 0
        %vm706 = vcmask 1043456
        %v708 = vsel %vm706, %v702, 0
        %710 = vmatpush.bf16.msra.mxu0 0
        %711 = vmatpush.bf16.msra.mxu0 0
        %712 = vmatpush.bf16.msra.mxu0 0
        %713 = vmatpush.bf16.msra.mxu0 0
        %714 = vmatpush.bf16.msra.mxu0 0
        %715 = vmatpush.bf16.msra.mxu0 0
        %716 = vmatpush.bf16.msra.mxu0 0
        %717 = vmatpush.bf16.msra.mxu0 %v708
        %718 = vmatmul.bf16.gmra.mxu0 %v704
        %v719 = vpop.f32.mrf.mxu0
        %v720 = vadd.f32 0.0, %v719
        %v721 = vpop.f32.mrf.mxu0
        %722 = vdwg.mxu0
        %v723 = vrcp.pop %v700
        %v724 = vmul.f32 %v720, %v723
        %v725 = vld [vmem:[#allocation2] sm:$0xff]
        %v726 = vpack.c.bf16 %v724, %v724
        %v727 = vld [vmem:[%s546] sm:$0xf]
        %v729 = vsel %vm672, %v726, 0
        %v732 = vsel %vm706, %v727, 0
        %734 = vmatpush.bf16.msra.mxu0 0
        %735 = vmatpush.bf16.msra.mxu0 0
        %736 = vmatpush.bf16.msra.mxu0 0
        %737 = vmatpush.bf16.msra.mxu0 0
        %738 = vmatpush.bf16.msra.mxu0 0
        %739 = vmatpush.bf16.msra.mxu0 0
        %740 = vmatpush.bf16.msra.mxu0 0
        %741 = vmatpush.bf16.msra.mxu0 %v732
        %742 = vmatmul.bf16.gmra.mxu0 %v729
        %v743 = vpop.f32.mrf.mxu0
        %v744 = vadd.f32 0.0, %v743
        %v745 = vpop.f32.mrf.mxu0
        %746 = vdwg.mxu0
        %v747 = vadd.f32 %v725, %v744
        %748 = vst.msk [vmem:[#allocation2] sm:$0xff] %vm580, %v747
        %p749 = scmp.eq.s32.totalorder %s30, 3
        // Predicated region
        $region69: #{tpu_custom_call.1} parent=63 // pred_check
          %p750 = pneg %p749
        $region70: #{tpu_custom_call.1} parent=63 // pred_check_branch
          %752 = sbr.rel (%p750) target = $region72
        $region71: #{tpu_custom_call.1} parent=63 // pred_region
          %v753 = vld [vmem:[#allocation2] sm:$0xff]
          %v754 = vld [vmem:[%s10] sm:$0x1]
          %v756 = vperm.slane %v754, 0
          %v758 = vadd.f32 %v753, %v756
          %759 = vst.msk [vmem:[%s506] sm:$0xff] %vm580, %v758
        $region72: #{tpu_custom_call.1} parent=63 // pred_fallthru
          _
        %s760 = sand.u32 %s326, 1
        %s761 = scalar_lea.sflag [#allocation4], %s760
        %s762 = sand.u32 %s326, 1
        %s763 = smul.addr %s762, 8
        %s764 = scalar_lea.vmem [#allocation3], %s763
        // Predicated region
        $region73: #{tpu_custom_call.1} parent=63 // pred_check
          %p765 = pneg %p336
        $region74: #{tpu_custom_call.1} parent=63 // pred_check_branch
          %767 = sbr.rel (%p765) target = $region76
        $region75: #{tpu_custom_call.1} parent=63 // pred_region
          %769 = vsyncadd %s761, 0
          %s770 = smul.addr %s29, 8
          %s771 = scalar_lea.hbm %s11, %s770
          %s773 = sshll.u32 %s764, 4
          %s774 = int_to_ptr.vmem [resolvable:$true] %s773
          %s775 = sshll.u32 %s771, 4
          %s776 = int_to_ptr.hbm [resolvable:$true] %s775
          %778 = dma.vmem_to_hbm [thread:$0]  %s774, 128, %s776, %s761
        $region76: #{tpu_custom_call.1} parent=63 // pred_fallthru
          _
      $region64: #{tpu_custom_call.1} parent=5 // pred_fallthru
        _
      %p779 = scmp.le.s32.totalorder 2, %s20
      // Predicated region
      $region77: #{tpu_custom_call.1} parent=5 // pred_check
        %p780 = pneg %p779
      $region78: #{tpu_custom_call.1} parent=5 // pred_check_branch
        %782 = sbr.rel (%p780) target = $region80
      $region79: #{tpu_custom_call.1} parent=5 // pred_region
        %s783 = ssub.s32 %s20, 2
        // Predicated region
        $region81: #{tpu_custom_call.1} parent=79 // pred_check
          %p784 = pneg %p342
        $region82: #{tpu_custom_call.1} parent=79 // pred_check_branch
          %786 = sbr.rel (%p784) target = $region84
        $region83: #{tpu_custom_call.1} parent=79 // pred_region
          %s787 = sand.u32 %s327, 1
          %s788 = scalar_lea.sflag [#allocation4], %s787
          %s789 = sand.u32 %s327, 1
          %s790 = smul.addr %s789, 8
          %s791 = scalar_lea.vmem [#allocation3], %s790
          %793 = dma.done %s788, 128
        $region84: #{tpu_custom_call.1} parent=79 // pred_fallthru
          _
      $region80: #{tpu_custom_call.1} parent=5 // pred_fallthru
        _
    $region6: #{tpu_custom_call.1} parent=1 // loop_footer
      %s24 = sadd.s32 1, %s20
    $region7: #{tpu_custom_call.1} parent=1 // loop_footer_branch
      %19 = sbr.rel target = $region3
    $region8: #{tpu_custom_call.1} parent=1 // loop_exit
      _
    %794 = vsyncpa [#allocation4], 1
    %s795 = scalar_lea.sflag [#allocation4], 1
    %796 = vsyncpa %s795, 1

</llo_original>
